<compile_context>
chip_gen: v7x
topology: tpu7x:2x2x1
jax: 0.10.0
libtpu: 0.0.40
codegen_flags: <defaults>
</compile_context>

<pallas_src>
import math
import numpy as np

import jax
import jax.numpy as jnp
from jax.experimental import pallas as pl
from jax.experimental.pallas import tpu as pltpu


_INV_SQRT2 = np.float32(1.0 / np.sqrt(2.0))


def _gelu_exact(x):
    # PyTorch nn.GELU() default = exact erf-based GELU (VPU polynomial).
    return 0.5 * x * (1.0 + jax.lax.erf(x * _INV_SQRT2))


def _gelu_tanh(x):
    # Production variant: tanh-approximate GELU runs on the (otherwise idle) EUP.
    return jax.nn.gelu(x, approximate=True)


# ---------------------------------------------------------------------------
# Kernel
# ---------------------------------------------------------------------------
def _make_tau_inr_kernel(num_linear, approximate_gelu, compute_dtype):
    """refs = [tau_packed, B_packed, W0_cos, W0_sin, b0,
               (W_1, b_1), ..., (W_{L-1}, b_{L-1}), out]"""
    act = _gelu_tanh if approximate_gelu else _gelu_exact

    def kernel(*refs):
        tau_ref, bp_ref, w0c_ref, w0s_ref, b0_ref = refs[:5]
        rest = refs[5:5 + 2 * (num_linear - 1)]
        out_ref = refs[5 + 2 * (num_linear - 1)]

        v = tau_ref[...]                                             # (tile_p, pack*F) f32
        # CFF phase: MUST stay f32 (B is scaled by 2**s; cos/sin of a bf16
        # phase would blow past tolerance).  One fused matmul, 2*pi pre-folded.
        vp = jnp.dot(v, bp_ref[...],
                     preferred_element_type=jnp.float32)             # (tile_p, pack*E)
        c = jnp.cos(vp).astype(compute_dtype)
        s = jnp.sin(vp).astype(compute_dtype)

        # First Linear fused as two accumulating matmuls (no concat buffer).
        x = (jnp.dot(c, w0c_ref[...], preferred_element_type=jnp.float32)
             + jnp.dot(s, w0s_ref[...], preferred_element_type=jnp.float32)
             + b0_ref[...])
        x = act(x)                                                   # f32 activations

        # Remaining Linear + GELU layers (bias add & GELU stay in f32).
        for li in range(num_linear - 1):
            w = rest[2 * li][...]                                    # (pack*fi, pack*fo)
            b = rest[2 * li + 1][...]                                # (1, pack*fo) f32
            x = jnp.dot(x.astype(compute_dtype), w,
                        preferred_element_type=jnp.float32) + b
            x = act(x)

        out_ref[...] = x.astype(out_ref.dtype)                       # lane-dense store

    return kernel


# ---------------------------------------------------------------------------
# Parameter preparation (one-time; do NOT call per forward pass)
# ---------------------------------------------------------------------------
def _block_diag(a, p):
    a = np.asarray(a, np.float32)
    r, c = a.shape
    out = np.zeros((p * r, p * c), np.float32)
    for j in range(p):
        out[j * r:(j + 1) * r, j * c:(j + 1) * c] = a
    return out


def _device_kind():
    try:
        return jax.devices()[0].device_kind.lower()
    except Exception:
        return ""


def choose_pack(out_features, device_kind=None):
    """Lane packing factor so packed widths match the MXU width of the chip."""
    kind = _device_kind() if device_kind is None else device_kind
    # v6e / v7x: 2x256^2 MXU -> target 256 lanes.  v5e and older: 128.
    mxu = 256 if any(t in kind for t in ("v6", "v7", "7x")) else 128
    return max(1, mxu // math.gcd(mxu, int(out_features)))


def _min_grid_steps(device_kind=None):
    """Dual-TensorCore chips want >=2 grid steps on the parallel axis."""
    kind = _device_kind() if device_kind is None else device_kind
    return 2 if any(t in kind for t in ("v7", "7x", "v4", "v5p")) else 1


def prepare_tau_inr_params(b_mats, weights, biases, *, out_features, pack,
                           mlp_dtype=jnp.float32):
    """Returns (B_packed, W0_cos, W0_sin, b0, W1, b1, ..., W_{L-1}, b_{L-1}).

    B_packed and all biases are f32; the MLP weight matrices are cast to
    `mlp_dtype` (use jnp.bfloat16 for the fast production path).
    """
    s_cff = len(b_mats)
    enc = out_features // 2
    E = enc * s_cff

    b_mats = [np.asarray(b, np.float32) for b in b_mats]
    weights = [np.asarray(w, np.float32) for w in weights]
    biases = [np.asarray(b, np.float32) for b in biases]

    # Fused CFF projection: fold 2*pi, pre-transpose, block-diag pack.
    b_cat = np.concatenate(b_mats, axis=0)                    # (E, F)
    bp = _block_diag((2.0 * np.pi * b_cat).T, pack)           # (pack*F, pack*E)

    # Permute W0 rows: original feature order [cos1, sin1, cos2, sin2, ...]
    # -> fused order [cos1..cosS | sin1..sinS], then split into the two halves
    # consumed by the accumulating first-layer matmuls.
    perm = np.concatenate(
        [np.arange(enc) + 2 * i * enc for i in range(s_cff)] +
        [np.arange(enc) + (2 * i + 1) * enc for i in range(s_cff)])
    w0_fused = weights[0][perm, :]                            # (2E, H)
    w0_cos = _block_diag(w0_fused[:E, :], pack)               # (pack*E, pack*H)
    w0_sin = _block_diag(w0_fused[E:, :], pack)               # (pack*E, pack*H)

    packed_ws = [w0_cos, w0_sin] + [_block_diag(w, pack) for w in weights[1:]]
    packed_bs = [np.tile(b, pack).reshape(1, -1) for b in biases]

    operands = [jnp.asarray(bp, jnp.float32),
                jnp.asarray(packed_ws[0], dtype=mlp_dtype),
                jnp.asarray(packed_ws[1], dtype=mlp_dtype),
                jnp.asarray(packed_bs[0], jnp.float32)]
    for w, b in zip(packed_ws[2:], packed_bs[1:]):
        operands.append(jnp.asarray(w, dtype=mlp_dtype))
        operands.append(jnp.asarray(b, jnp.float32))
    return tuple(operands)


def _round_up(x, m):
    return ((x + m - 1) // m) * m


# ---------------------------------------------------------------------------
# Wrapper
# ---------------------------------------------------------------------------
def tau_inr_pallas(tau, packed_params, *, out_features, pack, num_linear,
                   tile_rows_packed=1024, approximate_gelu=False,
                   compute_dtype=jnp.float32, out_dtype=jnp.float32,
                   min_grid_steps=1):
    """tau: (..., in_features) float32; packed_params from prepare_tau_inr_params."""
    lead_shape = tau.shape[:-1]
    F = tau.shape[-1]
    M = int(np.prod(lead_shape)) if lead_shape else 1

    tau2d = jnp.asarray(tau, jnp.float32).reshape(M, F)

    # Pack `pack` logical rows per physical row; sublane-aligned tile; make
    # sure dual-TC chips get at least `min_grid_steps` grid steps.
    Mp = -(-M // pack)                                        # packed rows needed
    tile_p = min(int(tile_rows_packed),
                 _round_up(-(-Mp // max(int(min_grid_steps), 1)), 8))
    tile_p = max(tile_p, 8)
    Mp_pad = _round_up(Mp, tile_p)
    M_pad = Mp_pad * pack

    if M_pad != M:
        # TODO(synk): handle the ragged tail inside the kernel (masked tail tile)
        # to avoid this extra HBM pad copy for very large M.
        tau2d = jnp.pad(tau2d, ((0, M_pad - M), (0, 0)))
    tau_packed = tau2d.reshape(Mp_pad, pack * F)              # free row-major reshape

    kernel = _make_tau_inr_kernel(num_linear, approximate_gelu, compute_dtype)

    in_specs = [pl.BlockSpec((tile_p, pack * F), lambda i: (i, 0))]
    for arr in packed_params:
        in_specs.append(pl.BlockSpec(arr.shape, lambda i: (0, 0)))

    # Rough per-tile VMEM footprint; raise the scoped-VMEM limit only if the
    # default (16 MiB on v5e / 32 MiB on v6e+) would be too small.
    E = packed_params[0].shape[1] // pack
    H = packed_params[1].shape[1] // pack
    cbytes = np.dtype(compute_dtype).itemsize
    obytes = np.dtype(out_dtype).itemsize
    vmem_est = tile_p * pack * (2 * 4 * F + 2 * obytes * out_features
                                + 4 * E + 2 * cbytes * E + 3 * 4 * H)
    vmem_est += 2 * sum(int(np.prod(p.shape)) * np.dtype(p.dtype).itemsize
                        for p in packed_params)
    cp_kwargs = dict(dimension_semantics=("parallel",))
    if vmem_est > (24 << 20):
        cp_kwargs["vmem_limit_bytes"] = int(min(vmem_est + (8 << 20), 120 << 20))

    out_packed = pl.pallas_call(
        kernel,
        out_shape=jax.ShapeDtypeStruct((Mp_pad, pack * out_features), out_dtype),
        grid_spec=pltpu.PrefetchScalarGridSpec(
            num_scalar_prefetch=0,
            grid=(Mp_pad // tile_p,),
            in_specs=in_specs,
            out_specs=pl.BlockSpec((tile_p, pack * out_features), lambda i: (i, 0)),
        ),
        compiler_params=pltpu.CompilerParams(**cp_kwargs),
    )(tau_packed, *packed_params)

    out = out_packed.reshape(M_pad, out_features)             # free unpack
    if M_pad != M:
        out = out[:M]
    return out.reshape(*lead_shape, out_features)


# ---------------------------------------------------------------------------
# Pure-JAX reference (mirrors the PyTorch module exactly)
# ---------------------------------------------------------------------------
def tau_inr_reference(tau, b_mats, weights, biases):
    feats = []
    for b in b_mats:
        vp = 2.0 * np.pi * (tau @ b.T)
        feats.append(jnp.cos(vp))
        feats.append(jnp.sin(vp))
    x = jnp.concatenate(feats, axis=-1)
    for w, bias in zip(weights, biases):
        x = x @ w + bias
        x = 0.5 * x * (1.0 + jax.lax.erf(x / jnp.sqrt(2.0)))
    return x


def init_params(key, *, in_features, hidden_features, s_cff, num_layers, out_features):
    """Deterministic synthetic init (shapes match the PyTorch module __init__)."""
    enc = out_features // 2
    keys = jax.random.split(key, 2 * s_cff + 4 * num_layers)
    ki = 0

    # CFF buffers b1..b_s:  randn(enc, in_features) * 2**s_i ,  s_i = 1..s_cff
    b_mats = []
    for s_i in range(1, s_cff + 1):
        b_mats.append(jax.random.normal(keys[ki], (enc, in_features), jnp.float32)
                      * np.float32(2.0 ** s_i))
        ki += 1

    # Linear stack: (out_features*s_cff -> hidden) + (hidden->hidden)*(num_layers-2)
    #               + (hidden -> out_features)
    dims = [out_features * s_cff, hidden_features]
    for _ in range(max(num_layers - 2, 0)):
        dims.append(hidden_features)
    dims.append(out_features)

    weights, biases = [], []
    for fan_in, fan_out in zip(dims[:-1], dims[1:]):
        bound = np.float32(1.0 / np.sqrt(fan_in))
        w = jax.random.uniform(keys[ki], (fan_in, fan_out), jnp.float32, -bound, bound)
        ki += 1
        bias = jax.random.uniform(keys[ki], (fan_out,), jnp.float32, -bound, bound)
        ki += 1
        weights.append(w)
        biases.append(bias)

    return b_mats, weights, biases


if __name__ == "__main__":
    # Small config consistent with the module
    in_features = 3
    hidden_features = 32
    s_cff = 2
    num_layers = 3          # -> 3 Linear layers total
    out_features = 32
    batch, seq = 2, 8       # M = 16 logical rows

    key = jax.random.PRNGKey(0)
    kp, kx = jax.random.split(key)
    b_mats, weights, biases = init_params(
        kp, in_features=in_features, hidden_features=hidden_features,
        s_cff=s_cff, num_layers=num_layers, out_features=out_features)

    tau = jax.random.uniform(kx, (batch, seq, in_features), jnp.float32)
    ref = tau_inr_reference(tau.reshape(-1, in_features),
                            b_mats, weights, biases).reshape(batch, seq, out_features)

    kind = _device_kind()
    pack = choose_pack(out_features, kind)          # 8 on v6e/v7x, 4 on v5e/older
    min_steps = _min_grid_steps(kind)

    # ---- validation path: exact erf GELU, f32 MLP (matches PyTorch numerics)
    params_f32 = prepare_tau_inr_params(
        b_mats, weights, biases, out_features=out_features, pack=pack,
        mlp_dtype=jnp.float32)
    out_exact = tau_inr_pallas(
        tau, params_f32, out_features=out_features, pack=pack,
        num_linear=len(weights), tile_rows_packed=1024,
        approximate_gelu=False, compute_dtype=jnp.float32,
        out_dtype=jnp.float32, min_grid_steps=min_steps)
    out_exact = jax.block_until_ready(out_exact)
    np.testing.assert_allclose(np.asarray(out_exact), np.asarray(ref),
                               rtol=1e-4, atol=1e-4)

    # ---- production path: tanh GELU (EUP) + bf16 MLP matmuls + bf16 output.
    # Numerics intentionally differ slightly from PyTorch; check loosely only.
    params_bf16 = prepare_tau_inr_params(
        b_mats, weights, biases, out_features=out_features, pack=pack,
        mlp_dtype=jnp.bfloat16)
    out_fast = tau_inr_pallas(
        tau, params_bf16, out_features=out_features, pack=pack,
        num_linear=len(weights), tile_rows_packed=1024,
        approximate_gelu=True, compute_dtype=jnp.bfloat16,
        out_dtype=jnp.bfloat16, min_grid_steps=min_steps)
    out_fast = jax.block_until_ready(out_fast)
    diff = np.max(np.abs(np.asarray(out_fast, np.float32) - np.asarray(ref)))
    assert np.all(np.isfinite(np.asarray(out_fast, np.float32))), "non-finite output"
    assert diff < 0.25, f"bf16/tanh fast path diverged too far: {diff}"

    print("KERNEL_OK")
</pallas_src>

<mosaic_0001>
module attributes {stable_mosaic.version = 11 : i64} {
  func.func @kernel(%arg0: i32, %arg1: memref<8x12xf32, #tpu.memory_space<vmem>>, %arg2: memref<12x128xf32, #tpu.memory_space<vmem>>, %arg3: memref<128x128xf32, #tpu.memory_space<vmem>>, %arg4: memref<128x128xf32, #tpu.memory_space<vmem>>, %arg5: memref<1x128xf32, #tpu.memory_space<vmem>>, %arg6: memref<128x128xf32, #tpu.memory_space<vmem>>, %arg7: memref<1x128xf32, #tpu.memory_space<vmem>>, %arg8: memref<128x128xf32, #tpu.memory_space<vmem>>, %arg9: memref<1x128xf32, #tpu.memory_space<vmem>>, %arg10: memref<8x128xf32, #tpu.memory_space<vmem>>) attributes {dimension_semantics = [#tpu.dimension_semantics<parallel>], iteration_bounds = array<i64: 1>, scalar_prefetch = 0 : i64, scratch_operands = 0 : i64, tpu.core_type = #tpu.core_type<tc>, window_params = [{transform_indices = @transform_0, window_bounds = array<i64: 8, 12>}, {pipeline_mode = #tpu.pipeline_mode<synchronous>, transform_indices = @transform_1, window_bounds = array<i64: 12, 128>}, {pipeline_mode = #tpu.pipeline_mode<synchronous>, transform_indices = @transform_2, window_bounds = array<i64: 128, 128>}, {pipeline_mode = #tpu.pipeline_mode<synchronous>, transform_indices = @transform_3, window_bounds = array<i64: 128, 128>}, {pipeline_mode = #tpu.pipeline_mode<synchronous>, transform_indices = @transform_4, window_bounds = array<i64: 1, 128>}, {pipeline_mode = #tpu.pipeline_mode<synchronous>, transform_indices = @transform_5, window_bounds = array<i64: 128, 128>}, {pipeline_mode = #tpu.pipeline_mode<synchronous>, transform_indices = @transform_6, window_bounds = array<i64: 1, 128>}, {pipeline_mode = #tpu.pipeline_mode<synchronous>, transform_indices = @transform_7, window_bounds = array<i64: 128, 128>}, {pipeline_mode = #tpu.pipeline_mode<synchronous>, transform_indices = @transform_8, window_bounds = array<i64: 1, 128>}, {transform_indices = @transform_9, window_bounds = array<i64: 8, 128>}]} {
    %c0 = arith.constant 0 : index
    %c0_0 = arith.constant 0 : index
    %0 = vector.load %arg1[%c0, %c0_0] : memref<8x12xf32, #tpu.memory_space<vmem>>, vector<8x12xf32>
    %c0_1 = arith.constant 0 : index
    %c0_2 = arith.constant 0 : index
    %1 = vector.load %arg2[%c0_1, %c0_2] : memref<12x128xf32, #tpu.memory_space<vmem>>, vector<12x128xf32>
    %cst = arith.constant dense<0.000000e+00> : vector<8x128xf32>
    %2 = tpu.matmul %0, %1, %cst {dimension_numbers = #tpu.dot_dimension_numbers<[1], [0], [0], [1], [0, 0, 1, 1], [], []>} : vector<8x12xf32>, vector<12x128xf32>, vector<8x128xf32> -> vector<8x128xf32>
    %3 = math.cos %2 : vector<8x128xf32>
    %4 = math.sin %2 : vector<8x128xf32>
    %c0_3 = arith.constant 0 : index
    %c0_4 = arith.constant 0 : index
    %5 = vector.load %arg3[%c0_3, %c0_4] : memref<128x128xf32, #tpu.memory_space<vmem>>, vector<128x128xf32>
    %cst_5 = arith.constant dense<0.000000e+00> : vector<8x128xf32>
    %6 = tpu.matmul %3, %5, %cst_5 {dimension_numbers = #tpu.dot_dimension_numbers<[1], [0], [0], [1], [0, 0, 1, 1], [], []>} : vector<8x128xf32>, vector<128x128xf32>, vector<8x128xf32> -> vector<8x128xf32>
    %c0_6 = arith.constant 0 : index
    %c0_7 = arith.constant 0 : index
    %7 = vector.load %arg4[%c0_6, %c0_7] : memref<128x128xf32, #tpu.memory_space<vmem>>, vector<128x128xf32>
    %cst_8 = arith.constant dense<0.000000e+00> : vector<8x128xf32>
    %8 = tpu.matmul %4, %7, %cst_8 {dimension_numbers = #tpu.dot_dimension_numbers<[1], [0], [0], [1], [0, 0, 1, 1], [], []>} : vector<8x128xf32>, vector<128x128xf32>, vector<8x128xf32> -> vector<8x128xf32>
    %9 = arith.addf %6, %8 : vector<8x128xf32>
    %c0_9 = arith.constant 0 : index
    %c0_10 = arith.constant 0 : index
    %10 = vector.load %arg5[%c0_9, %c0_10] : memref<1x128xf32, #tpu.memory_space<vmem>>, vector<1x128xf32>
    %11 = vector.broadcast %10 : vector<1x128xf32> to vector<8x128xf32>
    %12 = arith.addf %9, %11 : vector<8x128xf32>
    %cst_11 = arith.constant 5.000000e-01 : f32
    %13 = vector.broadcast %cst_11 : f32 to vector<8x128xf32>
    %14 = arith.mulf %13, %12 : vector<8x128xf32>
    %cst_12 = arith.constant 0.707106769 : f32
    %15 = vector.broadcast %cst_12 : f32 to vector<8x128xf32>
    %16 = arith.mulf %12, %15 : vector<8x128xf32>
    %17 = math.erf %16 : vector<8x128xf32>
    %cst_13 = arith.constant 1.000000e+00 : f32
    %18 = vector.broadcast %cst_13 : f32 to vector<8x128xf32>
    %19 = arith.addf %18, %17 : vector<8x128xf32>
    %20 = arith.mulf %14, %19 : vector<8x128xf32>
    %c0_14 = arith.constant 0 : index
    %c0_15 = arith.constant 0 : index
    %21 = vector.load %arg6[%c0_14, %c0_15] : memref<128x128xf32, #tpu.memory_space<vmem>>, vector<128x128xf32>
    %c0_16 = arith.constant 0 : index
    %c0_17 = arith.constant 0 : index
    %22 = vector.load %arg7[%c0_16, %c0_17] : memref<1x128xf32, #tpu.memory_space<vmem>>, vector<1x128xf32>
    %cst_18 = arith.constant dense<0.000000e+00> : vector<8x128xf32>
    %23 = tpu.matmul %20, %21, %cst_18 {dimension_numbers = #tpu.dot_dimension_numbers<[1], [0], [0], [1], [0, 0, 1, 1], [], []>} : vector<8x128xf32>, vector<128x128xf32>, vector<8x128xf32> -> vector<8x128xf32>
    %24 = vector.broadcast %22 : vector<1x128xf32> to vector<8x128xf32>
    %25 = arith.addf %23, %24 : vector<8x128xf32>
    %cst_19 = arith.constant 5.000000e-01 : f32
    %26 = vector.broadcast %cst_19 : f32 to vector<8x128xf32>
    %27 = arith.mulf %26, %25 : vector<8x128xf32>
    %cst_20 = arith.constant 0.707106769 : f32
    %28 = vector.broadcast %cst_20 : f32 to vector<8x128xf32>
    %29 = arith.mulf %25, %28 : vector<8x128xf32>
    %30 = math.erf %29 : vector<8x128xf32>
    %cst_21 = arith.constant 1.000000e+00 : f32
    %31 = vector.broadcast %cst_21 : f32 to vector<8x128xf32>
    %32 = arith.addf %31, %30 : vector<8x128xf32>
    %33 = arith.mulf %27, %32 : vector<8x128xf32>
    %c0_22 = arith.constant 0 : index
    %c0_23 = arith.constant 0 : index
    %34 = vector.load %arg8[%c0_22, %c0_23] : memref<128x128xf32, #tpu.memory_space<vmem>>, vector<128x128xf32>
    %c0_24 = arith.constant 0 : index
    %c0_25 = arith.constant 0 : index
    %35 = vector.load %arg9[%c0_24, %c0_25] : memref<1x128xf32, #tpu.memory_space<vmem>>, vector<1x128xf32>
    %cst_26 = arith.constant dense<0.000000e+00> : vector<8x128xf32>
    %36 = tpu.matmul %33, %34, %cst_26 {dimension_numbers = #tpu.dot_dimension_numbers<[1], [0], [0], [1], [0, 0, 1, 1], [], []>} : vector<8x128xf32>, vector<128x128xf32>, vector<8x128xf32> -> vector<8x128xf32>
    %37 = vector.broadcast %35 : vector<1x128xf32> to vector<8x128xf32>
    %38 = arith.addf %36, %37 : vector<8x128xf32>
    %cst_27 = arith.constant 5.000000e-01 : f32
    %39 = vector.broadcast %cst_27 : f32 to vector<8x128xf32>
    %40 = arith.mulf %39, %38 : vector<8x128xf32>
    %cst_28 = arith.constant 0.707106769 : f32
    %41 = vector.broadcast %cst_28 : f32 to vector<8x128xf32>
    %42 = arith.mulf %38, %41 : vector<8x128xf32>
    %43 = math.erf %42 : vector<8x128xf32>
    %cst_29 = arith.constant 1.000000e+00 : f32
    %44 = vector.broadcast %cst_29 : f32 to vector<8x128xf32>
    %45 = arith.addf %44, %43 : vector<8x128xf32>
    %46 = arith.mulf %40, %45 : vector<8x128xf32>
    %c0_30 = arith.constant 0 : index
    %c0_31 = arith.constant 0 : index
    %47 = vector.load %arg10[%c0_30, %c0_31] : memref<8x128xf32, #tpu.memory_space<vmem>>, vector<8x128xf32>
    tpu.vector_store %arg10[%c0_30, %c0_31], %46 {strides = array<i32>} : memref<8x128xf32, #tpu.memory_space<vmem>>, vector<8x128xf32>,
    return
  }
  func.func @transform_0(%arg0: i32) -> (i32, i32) {
    %c0_i32 = arith.constant 0 : i32
    %c0_i32_0 = arith.constant 0 : i32
    return %arg0, %c0_i32 : i32, i32
  }
  func.func @transform_1(%arg0: i32) -> (i32, i32) {
    %c0_i32 = arith.constant 0 : i32
    %c0_i32_0 = arith.constant 0 : i32
    %c0_i32_1 = arith.constant 0 : i32
    return %c0_i32, %c0_i32_0 : i32, i32
  }
  func.func @transform_2(%arg0: i32) -> (i32, i32) {
    %c0_i32 = arith.constant 0 : i32
    %c0_i32_0 = arith.constant 0 : i32
    %c0_i32_1 = arith.constant 0 : i32
    return %c0_i32, %c0_i32_0 : i32, i32
  }
  func.func @transform_3(%arg0: i32) -> (i32, i32) {
    %c0_i32 = arith.constant 0 : i32
    %c0_i32_0 = arith.constant 0 : i32
    %c0_i32_1 = arith.constant 0 : i32
    return %c0_i32, %c0_i32_0 : i32, i32
  }
  func.func @transform_4(%arg0: i32) -> (i32, i32) {
    %c0_i32 = arith.constant 0 : i32
    %c0_i32_0 = arith.constant 0 : i32
    %c0_i32_1 = arith.constant 0 : i32
    return %c0_i32, %c0_i32_0 : i32, i32
  }
  func.func @transform_5(%arg0: i32) -> (i32, i32) {
    %c0_i32 = arith.constant 0 : i32
    %c0_i32_0 = arith.constant 0 : i32
    %c0_i32_1 = arith.constant 0 : i32
    return %c0_i32, %c0_i32_0 : i32, i32
  }
  func.func @transform_6(%arg0: i32) -> (i32, i32) {
    %c0_i32 = arith.constant 0 : i32
    %c0_i32_0 = arith.constant 0 : i32
    %c0_i32_1 = arith.constant 0 : i32
    return %c0_i32, %c0_i32_0 : i32, i32
  }
  func.func @transform_7(%arg0: i32) -> (i32, i32) {
    %c0_i32 = arith.constant 0 : i32
    %c0_i32_0 = arith.constant 0 : i32
    %c0_i32_1 = arith.constant 0 : i32
    return %c0_i32, %c0_i32_0 : i32, i32
  }
  func.func @transform_8(%arg0: i32) -> (i32, i32) {
    %c0_i32 = arith.constant 0 : i32
    %c0_i32_0 = arith.constant 0 : i32
    %c0_i32_1 = arith.constant 0 : i32
    return %c0_i32, %c0_i32_0 : i32, i32
  }
  func.func @transform_9(%arg0: i32) -> (i32, i32) {
    %c0_i32 = arith.constant 0 : i32
    %c0_i32_0 = arith.constant 0 : i32
    return %arg0, %c0_i32 : i32, i32
  }
}

</mosaic_0001>

<llo_original>
// kernel: tpu_custom_call.1
$region0: #{tpu_custom_call.1}
  #allocation0 [shape = 'u32[]', space=smem, size = 0x4, offset = 0x4, fixed_abs, tag = 'smem constant byte address 0x4 - core index']
  #allocation1 [shape = 'u32[144,128]{1,0:T(1,128)}', space=vmem, size = 0x12000, scoped, tag = 'internal scratch']
  %s0 = inlined_call_operand.hbm [shape: f32[8,12], index: 0, kind: input, shape index: {}]
  %s1 = inlined_call_operand.hbm [shape: f32[12,128], index: 1, kind: input, shape index: {}]
  %s2 = inlined_call_operand.hbm [shape: f32[128,128], index: 2, kind: input, shape index: {}]
  %s3 = inlined_call_operand.hbm [shape: f32[128,128], index: 3, kind: input, shape index: {}]
  %s4 = inlined_call_operand.vmem [shape: f32[1,128], index: 4, kind: input, shape index: {}]
  %s5 = inlined_call_operand.hbm [shape: f32[128,128], index: 5, kind: input, shape index: {}]
  %s6 = inlined_call_operand.vmem [shape: f32[1,128], index: 6, kind: input, shape index: {}]
  %s7 = inlined_call_operand.hbm [shape: f32[128,128], index: 7, kind: input, shape index: {}]
  %s8 = inlined_call_operand.vmem [shape: f32[1,128], index: 8, kind: input, shape index: {}]
  %s9 = inlined_call_operand.hbm [shape: f32[8,128], index: 9, kind: output, shape index: {}]
  %s10 = sld [smem:[#allocation0]]
  $region70: #{tpu_custom_call.1} parent=0
    _
  %s12 = ssub.s32 1, %s10
  %s13 = scalar_select 0, %s12, %s10
  $region1: #{tpu_custom_call.1} parent=0
    #allocation2 [shape = 'u8[4096]{0}', space=vmem, size = 0x1000, scoped, tag = 'input window, operand 0, single buffered']
    #allocation3 [shape = 's32[1]{0}', space=sflag, size = 0x4, scoped, tag = 'scoped memory for tpu_custom_call.1']
    #allocation4 [shape = 's32[1]{0}', space=sflag, size = 0x4, scoped, tag = 'scoped memory for tpu_custom_call.1']
    #allocation5 [shape = 'u8[8192]{0}', space=vmem, size = 0x2000, scoped, tag = 'input window, operand 1, single buffered']
    #allocation6 [shape = 's32[1]{0}', space=sflag, size = 0x4, scoped, tag = 'scoped memory for tpu_custom_call.1']
    #allocation7 [shape = 'u8[65536]{0}', space=vmem, size = 0x10000, scoped, tag = 'input window, operand 2, single buffered']
    #allocation8 [shape = 'u8[65536]{0}', space=vmem, size = 0x10000, scoped, tag = 'input window, operand 3, single buffered']
    #allocation9 [shape = 's32[1]{0}', space=sflag, size = 0x4, scoped, tag = 'scoped memory for tpu_custom_call.1']
    #allocation10 [shape = 'u8[65536]{0}', space=vmem, size = 0x10000, scoped, tag = 'input window, operand 5, single buffered']
    #allocation11 [shape = 'u8[65536]{0}', space=vmem, size = 0x10000, scoped, tag = 'input window, operand 7, single buffered']
    #allocation12 [shape = 's32[1]{0}', space=sflag, size = 0x4, scoped, tag = 'scoped memory for tpu_custom_call.1']
    #allocation13 [shape = 'u8[4096]{0}', space=vmem, size = 0x1000, scoped, tag = 'output window, operand 0, single buffered']
    %14 = vsyncpa [#allocation3], 0
    %15 = vsyncpa [#allocation6], 0
    %16 = vsyncpa [#allocation9], 0
    %17 = vsyncpa [#allocation12], 0
    %18 = vsyncpa [#allocation4], 0
    // Predicated region
    $region2: #{tpu_custom_call.1} parent=1 // pred_check
      _
    $region3: #{tpu_custom_call.1} parent=1 // pred_check_branch
      %20 = sbr.rel (0) target = $region5
    $region4: #{tpu_custom_call.1} parent=1 // pred_region
      %s22 = ssub.s32 128, 128
      %23 = vsyncadd [#allocation3], %s22
      %s25 = sshll.u32 [#allocation2], 4
      %s26 = int_to_ptr.vmem [resolvable:$true] %s25
      %28 = dma.hbm_to_vmem [thread:$0]  %s0, 128, %s26, [#allocation3]
    $region5: #{tpu_custom_call.1} parent=1 // pred_fallthru
      _
    // Predicated region
    $region6: #{tpu_custom_call.1} parent=1 // pred_check
      _
    $region7: #{tpu_custom_call.1} parent=1 // pred_check_branch
      %30 = sbr.rel (0) target = $region9
    $region8: #{tpu_custom_call.1} parent=1 // pred_region
      %s32 = ssub.s32 256, 256
      %33 = vsyncadd [#allocation6], %s32
      %s34 = sshll.u32 [#allocation5], 4
      %s35 = int_to_ptr.vmem [resolvable:$true] %s34
      %40 = dma.hbm_to_vmem [thread:$0]  %s1, 256, %s35, [#allocation6], 128, 128, 8
    $region9: #{tpu_custom_call.1} parent=1 // pred_fallthru
      _
    // Predicated region
    $region10: #{tpu_custom_call.1} parent=1 // pred_check
      _
    $region11: #{tpu_custom_call.1} parent=1 // pred_check_branch
      %42 = sbr.rel (0) target = $region13
    $region12: #{tpu_custom_call.1} parent=1 // pred_region
      %s44 = ssub.s32 2048, 2048
      %45 = vsyncadd [#allocation6], %s44
      %s46 = sshll.u32 [#allocation7], 4
      %s47 = int_to_ptr.vmem [resolvable:$true] %s46
      %52 = dma.hbm_to_vmem [thread:$0]  %s2, 2048, %s47, [#allocation6], 128, 128, 8
    $region13: #{tpu_custom_call.1} parent=1 // pred_fallthru
      _
    // Predicated region
    $region14: #{tpu_custom_call.1} parent=1 // pred_check
      _
    $region15: #{tpu_custom_call.1} parent=1 // pred_check_branch
      %54 = sbr.rel (0) target = $region17
    $region16: #{tpu_custom_call.1} parent=1 // pred_region
      %s56 = ssub.s32 2048, 2048
      %57 = vsyncadd [#allocation9], %s56
      %s58 = sshll.u32 [#allocation8], 4
      %s59 = int_to_ptr.vmem [resolvable:$true] %s58
      %64 = dma.hbm_to_vmem [thread:$0]  %s3, 2048, %s59, [#allocation9], 128, 128, 8
    $region17: #{tpu_custom_call.1} parent=1 // pred_fallthru
      _
    // Predicated region
    $region18: #{tpu_custom_call.1} parent=1 // pred_check
      _
    $region19: #{tpu_custom_call.1} parent=1 // pred_check_branch
      %66 = sbr.rel (0) target = $region21
    $region20: #{tpu_custom_call.1} parent=1 // pred_region
      _
    $region21: #{tpu_custom_call.1} parent=1 // pred_fallthru
      _
    // Predicated region
    $region22: #{tpu_custom_call.1} parent=1 // pred_check
      _
    $region23: #{tpu_custom_call.1} parent=1 // pred_check_branch
      %68 = sbr.rel (0) target = $region25
    $region24: #{tpu_custom_call.1} parent=1 // pred_region
      %s70 = ssub.s32 2048, 2048
      %71 = vsyncadd [#allocation9], %s70
      %s72 = sshll.u32 [#allocation10], 4
      %s73 = int_to_ptr.vmem [resolvable:$true] %s72
      %78 = dma.hbm_to_vmem [thread:$0]  %s5, 2048, %s73, [#allocation9], 128, 128, 8
    $region25: #{tpu_custom_call.1} parent=1 // pred_fallthru
      _
    // Predicated region
    $region26: #{tpu_custom_call.1} parent=1 // pred_check
      _
    $region27: #{tpu_custom_call.1} parent=1 // pred_check_branch
      %80 = sbr.rel (0) target = $region29
    $region28: #{tpu_custom_call.1} parent=1 // pred_region
      _
    $region29: #{tpu_custom_call.1} parent=1 // pred_fallthru
      _
    // Predicated region
    $region30: #{tpu_custom_call.1} parent=1 // pred_check
      _
    $region31: #{tpu_custom_call.1} parent=1 // pred_check_branch
      %82 = sbr.rel (0) target = $region33
    $region32: #{tpu_custom_call.1} parent=1 // pred_region
      %s84 = ssub.s32 2048, 2048
      %85 = vsyncadd [#allocation12], %s84
      %s86 = sshll.u32 [#allocation11], 4
      %s87 = int_to_ptr.vmem [resolvable:$true] %s86
      %92 = dma.hbm_to_vmem [thread:$0]  %s7, 2048, %s87, [#allocation12], 128, 128, 8
    $region33: #{tpu_custom_call.1} parent=1 // pred_fallthru
      _
    // Predicated region
    $region34: #{tpu_custom_call.1} parent=1 // pred_check
      _
    $region35: #{tpu_custom_call.1} parent=1 // pred_check_branch
      %94 = sbr.rel (0) target = $region37
    $region36: #{tpu_custom_call.1} parent=1 // pred_region
      _
    $region37: #{tpu_custom_call.1} parent=1 // pred_fallthru
      _
    // Predicated region
    $region38: #{tpu_custom_call.1} parent=1 // pred_check
      _
    $region39: #{tpu_custom_call.1} parent=1 // pred_check_branch
      %96 = sbr.rel (0) target = $region41
    $region40: #{tpu_custom_call.1} parent=1 // pred_region
      %97 = dma.done [#allocation3], 128
    $region41: #{tpu_custom_call.1} parent=1 // pred_fallthru
      _
    // Predicated region
    $region42: #{tpu_custom_call.1} parent=1 // pred_check
      _
    $region43: #{tpu_custom_call.1} parent=1 // pred_check_branch
      %99 = sbr.rel (0) target = $region45
    $region44: #{tpu_custom_call.1} parent=1 // pred_region
      %100 = dma.done [#allocation6], 256
    $region45: #{tpu_custom_call.1} parent=1 // pred_fallthru
      _
    // Predicated region
    $region46: #{tpu_custom_call.1} parent=1 // pred_check
      _
    $region47: #{tpu_custom_call.1} parent=1 // pred_check_branch
      %102 = sbr.rel (0) target = $region49
    $region48: #{tpu_custom_call.1} parent=1 // pred_region
      %103 = dma.done [#allocation6], 2048
    $region49: #{tpu_custom_call.1} parent=1 // pred_fallthru
      _
    // Predicated region
    $region50: #{tpu_custom_call.1} parent=1 // pred_check
      _
    $region51: #{tpu_custom_call.1} parent=1 // pred_check_branch
      %105 = sbr.rel (0) target = $region53
    $region52: #{tpu_custom_call.1} parent=1 // pred_region
      %106 = dma.done [#allocation9], 2048
    $region53: #{tpu_custom_call.1} parent=1 // pred_fallthru
      _
    // Predicated region
    $region54: #{tpu_custom_call.1} parent=1 // pred_check
      _
    $region55: #{tpu_custom_call.1} parent=1 // pred_check_branch
      %108 = sbr.rel (0) target = $region57
    $region56: #{tpu_custom_call.1} parent=1 // pred_region
      %109 = dma.done [#allocation9], 2048
    $region57: #{tpu_custom_call.1} parent=1 // pred_fallthru
      _
    // Predicated region
    $region58: #{tpu_custom_call.1} parent=1 // pred_check
      _
    $region59: #{tpu_custom_call.1} parent=1 // pred_check_branch
      %111 = sbr.rel (0) target = $region61
    $region60: #{tpu_custom_call.1} parent=1 // pred_region
      %112 = dma.done [#allocation12], 2048
    $region61: #{tpu_custom_call.1} parent=1 // pred_fallthru
      _
    %v113 = vld [vmem:[#allocation2] sm:$0xff]
    %v114 = vld [vmem:[#allocation5] sm:$0xff]
    %v115 = vld [vmem:[#allocation5 + $0x8] sm:$0xf]
    %vm116 = vcmask 97280
    %v118 = vsel %vm116, %v113, 0
    %vm120 = vcmask 1043456
    %v122 = vsel %vm120, %v115, 0
    %124 = vmatprep.subr.mxu0 0.0
    %125 = vmatpush1.msra.mxu0 %v114
    %126 = vmatprep.subr.mxu0 0.0
    %127 = vmatpush1.msra.mxu0 %v122
    %128 = vmatprep.subr.mxu0 0.0
    %129 = vmatpush1.msra.mxu0 0.0
    %130 = vmatprep.subr.mxu0 0.0
    %131 = vmatpush1.msra.mxu0 0.0
    %132 = vmatprep.subr.mxu0 0.0
    %133 = vmatpush1.msra.mxu0 0.0
    %134 = vmatprep.subr.mxu0 0.0
    %135 = vmatpush1.msra.mxu0 0.0
    %136 = vmatprep.subr.mxu0 0.0
    %137 = vmatpush1.msra.mxu0 0.0
    %138 = vmatprep.subr.mxu0 0.0
    %139 = vmatpush1.msra.mxu0 0.0
    %140 = vmatprep.subr.mxu0 0.0
    %141 = vmatpush1.msra.mxu0 0.0
    %142 = vmatprep.subr.mxu0 0.0
    %143 = vmatpush1.msra.mxu0 0.0
    %144 = vmatprep.subr.mxu0 0.0
    %145 = vmatpush1.msra.mxu0 0.0
    %146 = vmatprep.subr.mxu0 0.0
    %147 = vmatpush1.msra.mxu0 0.0
    %148 = vmatprep.subr.mxu0 0.0
    %149 = vmatpush1.msra.mxu0 0.0
    %150 = vmatprep.subr.mxu0 0.0
    %151 = vmatpush1.msra.mxu0 0.0
    %152 = vmatprep.subr.mxu0 0.0
    %153 = vmatpush1.msra.mxu0 0.0
    %154 = vmatprep.subr.mxu0 0.0
    %155 = vmatpush1.msra.mxu0 0.0
    %156 = vmatprep.subr.mxu0 0.0
    %157 = vmatpush1.msra.mxu0 0.0
    %158 = vmatprep.subr.mxu0 0.0
    %159 = vmatpush1.msra.mxu0 0.0
    %160 = vmatprep.subr.mxu0 0.0
    %161 = vmatpush1.msra.mxu0 0.0
    %162 = vmatprep.subr.mxu0 0.0
    %163 = vmatpush1.msra.mxu0 0.0
    %164 = vmatprep.subr.mxu0 0.0
    %165 = vmatpush1.msra.mxu0 0.0
    %166 = vmatprep.subr.mxu0 0.0
    %167 = vmatpush1.msra.mxu0 0.0
    %168 = vmatprep.subr.mxu0 0.0
    %169 = vmatpush1.msra.mxu0 0.0
    %170 = vmatprep.subr.mxu0 0.0
    %171 = vmatpush1.msra.mxu0 0.0
    %172 = vmatprep.subr.mxu0 0.0
    %173 = vmatpush1.msra.mxu0 0.0
    %174 = vmatprep.subr.mxu0 0.0
    %175 = vmatpush1.msra.mxu0 0.0
    %176 = vmatprep.subr.mxu0 0.0
    %177 = vmatpush1.msra.mxu0 0.0
    %178 = vmatprep.subr.mxu0 0.0
    %179 = vmatpush1.msra.mxu0 0.0
    %180 = vmatprep.subr.mxu0 0.0
    %181 = vmatpush1.msra.mxu0 0.0
    %182 = vmatprep.subr.mxu0 0.0
    %183 = vmatpush1.msra.mxu0 0.0
    %184 = vmatprep.subr.mxu0 0.0
    %185 = vmatpush1.msra.mxu0 0.0
    %186 = vmatprep.subr.mxu0 0.0
    %187 = vmatpush1.msra.mxu0 0.0
    %188 = vmatprep.mubr.f32.mxu0 0.0
    %189 = vmatmul.mubr.f32.gmra.mrb[0].mxu0 %v118
    %v190 = vpop.f32.mrb[0].mxu0
    %v191 = vadd.f32 0.0, %v190
    %v192 = vpop.f32.mrb[0].mxu0
    %193 = vdwg.mxu0
    %v194 = vand.u32 2147483647, %v191
    %vm195 = vcmp.le.f32.partialorder %v194, 0.7853982
    %vm196 = vcmp.lt.s32.totalorder %v191, 0
    %v197 = vand.u32 %v191, 2139095040
    %v198 = vshrl.u32 %v197, 23
    %v199 = vsub.s32 %v198, 127
    %v200 = vand.u32 2147483647, %v191
    %v201 = vand.u32 %v200, 8388607
    %v202 = vor.u32 %v201, 8388608
    %v203 = vsub.s32 0, %v202
    %v204 = vadd.s32 %v199, 1
    %vm205 = vcmp.gt.s32.totalorder %v204, 0
    %v206 = vsel %vm205, %v204, 0
    %v207 = vshrl.u32 %v206, 5
    %v208 = vand.u32 %v206, 31
    %v209 = vsub.s32 32, %v208
    %v210 = vshrl.u32 683565275, %v209
    %v211 = vshll.u32 683565275, %v208
    %v212 = vshrl.u32 2475754826, %v209
    %v213 = vor.u32 %v211, %v212
    %v214 = vshll.u32 2475754826, %v208
    %v215 = vshrl.u32 2131351028, %v209
    %v216 = vor.u32 %v214, %v215
    %v217 = vshll.u32 2131351028, %v208
    %v218 = vshrl.u32 2102212464, %v209
    %v219 = vor.u32 %v217, %v218
    %v220 = vshll.u32 2102212464, %v208
    %v221 = vshrl.u32 920167782, %v209
    %v222 = vor.u32 %v220, %v221
    %v223 = vshll.u32 920167782, %v208
    %v224 = vshrl.u32 1326507024, %v209
    %v225 = vor.u32 %v223, %v224
    %vm226 = vcmp.lt.s32.totalorder %v207, 1
    %vm227 = vcmp.lt.s32.totalorder %v207, 2
    %vm228 = vcmp.lt.s32.totalorder %v207, 3
    %vm229 = vcmp.lt.s32.totalorder %v207, 4
    %v230 = vsel %vm226, %v210, %v213
    %v231 = vsel %vm229, %v219, 2102212464
    %v232 = vsel %vm228, %v216, %v231
    %v233 = vsel %vm227, %v230, %v232
    %v234 = vsel %vm226, %v213, %v216
    %v235 = vsel %vm229, %v222, 920167782
    %v236 = vsel %vm228, %v219, %v235
    %v237 = vsel %vm227, %v234, %v236
    %v238 = vsel %vm226, %v216, %v219
    %v239 = vsel %vm229, %v225, 1326507024
    %v240 = vsel %vm228, %v222, %v239
    %v241 = vsel %vm227, %v238, %v240
    %v242 = vshll.u32 %v202, 8
    %v243 = vmul.u32.u64.compose %v242, %v241
    %v244 = vextract.low.u32 %v243
    %v245 = vextract.high.u32 %v243
    %v246 = vmul.u32.u64.compose %v242, %v237
    %v247 = vextract.low.u32 %v246
    %v248 = vextract.high.u32 %v246
    %v249 = vmul.u32 %v242, %v233
    %v250 = vadd.s32 %v245, %v247
    %vm251 = vc.u32 %v245, %v247
    %v252 = vadd.s32 %v248, 1
    %v253 = vsel %vm251, %v252, %v248
    %v254 = vadd.s32 %v249, %v253
    %v255 = vadd.s32 %v254, 536870912
    %v256 = vshrl.u32 %v255, 30
    %v257 = vshll.u32 %v256, 30
    %v258 = vsub.s32 %v254, %v257
    %vm259 = vcmp.lt.s32.totalorder %v258, 0
    %v260 = vsub.s32 0, %v258
    %v261 = vsel %vm259, %v260, %v258
    %v262 = vclz %v261
    %v263 = vsub.s32 %v262, 2
    %vm264 = vcmp.gt.s32.totalorder 0, %v263
    %v265 = vsel %vm264, 0, %v263
    %v266 = vsub.s32 32, %v265
    %v267 = vshll.u32 %v258, %v265
    %v268 = vshrl.u32 %v250, %v266
    %v269 = vor.u32 %v267, %v268
    %v270 = vsub.s32 4294967266, %v265
    %v271 = vadd.s32 %v270, 127
    %v272 = vshll.u32 %v271, 23
    %v273 = vor.u32 4788187, %v272
    %v274 = vand.u32 2147483647, %v273
    %v276 = vcvt.s32.f32 %v269
    %v277 = vmul.f32 %v276, %v274
    %v278 = vxor.u32 %v277, 2147483648
    %v279 = vsel %vm196, %v278, %v277
    %v280 = vsub.s32 4, %v256
    %v281 = vsel %vm196, %v280, %v256
    %v282 = vsel %vm195, %v191, %v279
    %v283 = vsel %vm195, 0, %v281
    %v284 = vcosq.f32.pop %v282
    %v285 = vsinq.f32.pop %v282
    %vm286 = vweird.f32 %v191
    %v287 = vand.u32 %v283, 3
    %vm288 = vcmp.lt.s32.totalorder %v287, 2
    %vm289 = vcmp.eq.s32.totalorder %v287, 0
    %v290 = vxor.u32 %v285, 2147483648
    %v291 = vsel %vm289, %v284, %v290
    %vm292 = vcmp.eq.s32.totalorder %v287, 2
    %v293 = vxor.u32 %v284, 2147483648
    %v294 = vsel %vm292, %v293, %v285
    %v295 = vsel %vm288, %v291, %v294
    %v296 = vsel %vm286, nan, %v295
    %v297 = vand.u32 2147483647, %v191
    %vm298 = vcmp.le.f32.partialorder %v297, 0.7853982
    %vm299 = vcmp.lt.s32.totalorder %v191, 0
    %v300 = vand.u32 %v191, 2139095040
    %v301 = vshrl.u32 %v300, 23
    %v302 = vsub.s32 %v301, 127
    %v303 = vand.u32 2147483647, %v191
    %v304 = vand.u32 %v303, 8388607
    %v305 = vor.u32 %v304, 8388608
    %v306 = vsub.s32 0, %v305
    %v307 = vadd.s32 %v302, 1
    %vm308 = vcmp.gt.s32.totalorder %v307, 0
    %v309 = vsel %vm308, %v307, 0
    %v310 = vshrl.u32 %v309, 5
    %v311 = vand.u32 %v309, 31
    %v312 = vsub.s32 32, %v311
    %v313 = vshrl.u32 683565275, %v312
    %v314 = vshll.u32 683565275, %v311
    %v315 = vshrl.u32 2475754826, %v312
    %v316 = vor.u32 %v314, %v315
    %v317 = vshll.u32 2475754826, %v311
    %v318 = vshrl.u32 2131351028, %v312
    %v319 = vor.u32 %v317, %v318
    %v320 = vshll.u32 2131351028, %v311
    %v321 = vshrl.u32 2102212464, %v312
    %v322 = vor.u32 %v320, %v321
    %v323 = vshll.u32 2102212464, %v311
    %v324 = vshrl.u32 920167782, %v312
    %v325 = vor.u32 %v323, %v324
    %v326 = vshll.u32 920167782, %v311
    %v327 = vshrl.u32 1326507024, %v312
    %v328 = vor.u32 %v326, %v327
    %vm329 = vcmp.lt.s32.totalorder %v310, 1
    %vm330 = vcmp.lt.s32.totalorder %v310, 2
    %vm331 = vcmp.lt.s32.totalorder %v310, 3
    %vm332 = vcmp.lt.s32.totalorder %v310, 4
    %v333 = vsel %vm329, %v313, %v316
    %v334 = vsel %vm332, %v322, 2102212464
    %v335 = vsel %vm331, %v319, %v334
    %v336 = vsel %vm330, %v333, %v335
    %v337 = vsel %vm329, %v316, %v319
    %v338 = vsel %vm332, %v325, 920167782
    %v339 = vsel %vm331, %v322, %v338
    %v340 = vsel %vm330, %v337, %v339
    %v341 = vsel %vm329, %v319, %v322
    %v342 = vsel %vm332, %v328, 1326507024
    %v343 = vsel %vm331, %v325, %v342
    %v344 = vsel %vm330, %v341, %v343
    %v345 = vshll.u32 %v305, 8
    %v346 = vmul.u32.u64.compose %v345, %v344
    %v347 = vextract.low.u32 %v346
    %v348 = vextract.high.u32 %v346
    %v349 = vmul.u32.u64.compose %v345, %v340
    %v350 = vextract.low.u32 %v349
    %v351 = vextract.high.u32 %v349
    %v352 = vmul.u32 %v345, %v336
    %v353 = vadd.s32 %v348, %v350
    %vm354 = vc.u32 %v348, %v350
    %v355 = vadd.s32 %v351, 1
    %v356 = vsel %vm354, %v355, %v351
    %v357 = vadd.s32 %v352, %v356
    %v358 = vadd.s32 %v357, 536870912
    %v359 = vshrl.u32 %v358, 30
    %v360 = vshll.u32 %v359, 30
    %v361 = vsub.s32 %v357, %v360
    %vm362 = vcmp.lt.s32.totalorder %v361, 0
    %v363 = vsub.s32 0, %v361
    %v364 = vsel %vm362, %v363, %v361
    %v365 = vclz %v364
    %v366 = vsub.s32 %v365, 2
    %vm367 = vcmp.gt.s32.totalorder 0, %v366
    %v368 = vsel %vm367, 0, %v366
    %v369 = vsub.s32 32, %v368
    %v370 = vshll.u32 %v361, %v368
    %v371 = vshrl.u32 %v353, %v369
    %v372 = vor.u32 %v370, %v371
    %v373 = vsub.s32 4294967266, %v368
    %v374 = vadd.s32 %v373, 127
    %v375 = vshll.u32 %v374, 23
    %v376 = vor.u32 4788187, %v375
    %v377 = vand.u32 2147483647, %v376
    %v379 = vcvt.s32.f32 %v372
    %v380 = vmul.f32 %v379, %v377
    %v381 = vxor.u32 %v380, 2147483648
    %v382 = vsel %vm299, %v381, %v380
    %v383 = vsub.s32 4, %v359
    %v384 = vsel %vm299, %v383, %v359
    %v385 = vsel %vm298, %v191, %v382
    %v386 = vsel %vm298, 0, %v384
    %v387 = vcosq.f32.pop %v385
    %v388 = vsinq.f32.pop %v385
    %vm389 = vweird.f32 %v191
    %v390 = vadd.s32 %v386, 3
    %v391 = vand.u32 %v390, 3
    %vm392 = vcmp.lt.s32.totalorder %v391, 2
    %vm393 = vcmp.eq.s32.totalorder %v391, 0
    %v394 = vxor.u32 %v388, 2147483648
    %v395 = vsel %vm393, %v387, %v394
    %vm396 = vcmp.eq.s32.totalorder %v391, 2
    %v397 = vxor.u32 %v387, 2147483648
    %v398 = vsel %vm396, %v397, %v388
    %v399 = vsel %vm392, %v395, %v398
    %v400 = vsel %vm389, nan, %v399
    %v401 = vld [vmem:[#allocation7] sm:$0xff]
    %v402 = vld [vmem:[#allocation7 + $0x8] sm:$0xff]
    %v403 = vld [vmem:[#allocation7 + $0x10] sm:$0xff]
    %v404 = vld [vmem:[#allocation7 + $0x18] sm:$0xff]
    %v405 = vld [vmem:[#allocation7 + $0x20] sm:$0xff]
    %v406 = vld [vmem:[#allocation7 + $0x28] sm:$0xff]
    %v407 = vld [vmem:[#allocation7 + $0x30] sm:$0xff]
    %v408 = vld [vmem:[#allocation7 + $0x38] sm:$0xff]
    %v409 = vld [vmem:[#allocation7 + $0x40] sm:$0xff]
    %v410 = vld [vmem:[#allocation7 + $0x48] sm:$0xff]
    %v411 = vld [vmem:[#allocation7 + $0x50] sm:$0xff]
    %v412 = vld [vmem:[#allocation7 + $0x58] sm:$0xff]
    %v413 = vld [vmem:[#allocation7 + $0x60] sm:$0xff]
    %v414 = vld [vmem:[#allocation7 + $0x68] sm:$0xff]
    %v415 = vld [vmem:[#allocation7 + $0x70] sm:$0xff]
    %v416 = vld [vmem:[#allocation7 + $0x78] sm:$0xff]
    %v417 = vld [vmem:[#allocation8] sm:$0xff]
    %v418 = vld [vmem:[#allocation8 + $0x8] sm:$0xff]
    %v419 = vld [vmem:[#allocation8 + $0x10] sm:$0xff]
    %v420 = vld [vmem:[#allocation8 + $0x18] sm:$0xff]
    %v421 = vld [vmem:[#allocation8 + $0x20] sm:$0xff]
    %v422 = vld [vmem:[#allocation8 + $0x28] sm:$0xff]
    %v423 = vld [vmem:[#allocation8 + $0x30] sm:$0xff]
    %v424 = vld [vmem:[#allocation8 + $0x38] sm:$0xff]
    %v425 = vld [vmem:[#allocation8 + $0x40] sm:$0xff]
    %v426 = vld [vmem:[#allocation8 + $0x48] sm:$0xff]
    %v427 = vld [vmem:[#allocation8 + $0x50] sm:$0xff]
    %v428 = vld [vmem:[#allocation8 + $0x58] sm:$0xff]
    %v429 = vld [vmem:[#allocation8 + $0x60] sm:$0xff]
    %v430 = vld [vmem:[#allocation8 + $0x68] sm:$0xff]
    %v431 = vld [vmem:[#allocation8 + $0x70] sm:$0xff]
    %v432 = vld [vmem:[#allocation8 + $0x78] sm:$0xff]
    %433 = vmatprep.subr.mxu0 0.0
    %434 = vmatpush1.msra.mxu0 %v417
    %435 = vmatprep.subr.mxu0 0.0
    %436 = vmatpush1.msra.mxu0 %v418
    %437 = vmatprep.subr.mxu0 0.0
    %438 = vmatpush1.msra.mxu0 %v419
    %439 = vmatprep.subr.mxu0 0.0
    %440 = vmatpush1.msra.mxu0 %v420
    %441 = vmatprep.subr.mxu0 0.0
    %442 = vmatpush1.msra.mxu0 %v421
    %443 = vmatprep.subr.mxu0 0.0
    %444 = vmatpush1.msra.mxu0 %v422
    %445 = vmatprep.subr.mxu0 0.0
    %446 = vmatpush1.msra.mxu0 %v423
    %447 = vmatprep.subr.mxu0 0.0
    %448 = vmatpush1.msra.mxu0 %v424
    %449 = vmatprep.subr.mxu0 0.0
    %450 = vmatpush1.msra.mxu0 %v425
    %451 = vmatprep.subr.mxu0 0.0
    %452 = vmatpush1.msra.mxu0 %v426
    %453 = vmatprep.subr.mxu0 0.0
    %454 = vmatpush1.msra.mxu0 %v427
    %455 = vmatprep.subr.mxu0 0.0
    %456 = vmatpush1.msra.mxu0 %v428
    %457 = vmatprep.subr.mxu0 0.0
    %458 = vmatpush1.msra.mxu0 %v429
    %459 = vmatprep.subr.mxu0 0.0
    %460 = vmatpush1.msra.mxu0 %v430
    %461 = vmatprep.subr.mxu0 0.0
    %462 = vmatpush1.msra.mxu0 %v431
    %463 = vmatprep.subr.mxu0 0.0
    %464 = vmatpush1.msra.mxu0 %v432
    %465 = vmatprep.subr.mxu0 0.0
    %466 = vmatpush1.msra.mxu0 0.0
    %467 = vmatprep.subr.mxu0 0.0
    %468 = vmatpush1.msra.mxu0 0.0
    %469 = vmatprep.subr.mxu0 0.0
    %470 = vmatpush1.msra.mxu0 0.0
    %471 = vmatprep.subr.mxu0 0.0
    %472 = vmatpush1.msra.mxu0 0.0
    %473 = vmatprep.subr.mxu0 0.0
    %474 = vmatpush1.msra.mxu0 0.0
    %475 = vmatprep.subr.mxu0 0.0
    %476 = vmatpush1.msra.mxu0 0.0
    %477 = vmatprep.subr.mxu0 0.0
    %478 = vmatpush1.msra.mxu0 0.0
    %479 = vmatprep.subr.mxu0 0.0
    %480 = vmatpush1.msra.mxu0 0.0
    %481 = vmatprep.subr.mxu0 0.0
    %482 = vmatpush1.msra.mxu0 0.0
    %483 = vmatprep.subr.mxu0 0.0
    %484 = vmatpush1.msra.mxu0 0.0
    %485 = vmatprep.subr.mxu0 0.0
    %486 = vmatpush1.msra.mxu0 0.0
    %487 = vmatprep.subr.mxu0 0.0
    %488 = vmatpush1.msra.mxu0 0.0
    %489 = vmatprep.subr.mxu0 0.0
    %490 = vmatpush1.msra.mxu0 0.0
    %491 = vmatprep.subr.mxu0 0.0
    %492 = vmatpush1.msra.mxu0 0.0
    %493 = vmatprep.subr.mxu0 0.0
    %494 = vmatpush1.msra.mxu0 0.0
    %495 = vmatprep.subr.mxu0 0.0
    %496 = vmatpush1.msra.mxu0 0.0
    %497 = vmatprep.mubr.f32.mxu0 0.0
    %498 = vmatmul.mubr.f32.gmra.mrb[0].mxu0 %v400
    %v499 = vpop.f32.mrb[0].mxu0
    %v500 = vadd.f32 0.0, %v499
    %v501 = vpop.f32.mrb[0].mxu0
    %502 = vdwg.mxu0
    %503 = vmatprep.subr.mxu0 0.0
    %504 = vmatpush1.msra.mxu0 %v401
    %505 = vmatprep.subr.mxu0 0.0
    %506 = vmatpush1.msra.mxu0 %v402
    %507 = vmatprep.subr.mxu0 0.0
    %508 = vmatpush1.msra.mxu0 %v403
    %509 = vmatprep.subr.mxu0 0.0
    %510 = vmatpush1.msra.mxu0 %v404
    %511 = vmatprep.subr.mxu0 0.0
    %512 = vmatpush1.msra.mxu0 %v405
    %513 = vmatprep.subr.mxu0 0.0
    %514 = vmatpush1.msra.mxu0 %v406
    %515 = vmatprep.subr.mxu0 0.0
    %516 = vmatpush1.msra.mxu0 %v407
    %517 = vmatprep.subr.mxu0 0.0
    %518 = vmatpush1.msra.mxu0 %v408
    %519 = vmatprep.subr.mxu0 0.0
    %520 = vmatpush1.msra.mxu0 %v409
    %521 = vmatprep.subr.mxu0 0.0
    %522 = vmatpush1.msra.mxu0 %v410
    %523 = vmatprep.subr.mxu0 0.0
    %524 = vmatpush1.msra.mxu0 %v411
    %525 = vmatprep.subr.mxu0 0.0
    %526 = vmatpush1.msra.mxu0 %v412
    %527 = vmatprep.subr.mxu0 0.0
    %528 = vmatpush1.msra.mxu0 %v413
    %529 = vmatprep.subr.mxu0 0.0
    %530 = vmatpush1.msra.mxu0 %v414
    %531 = vmatprep.subr.mxu0 0.0
    %532 = vmatpush1.msra.mxu0 %v415
    %533 = vmatprep.subr.mxu0 0.0
    %534 = vmatpush1.msra.mxu0 %v416
    %535 = vmatprep.subr.mxu0 0.0
    %536 = vmatpush1.msra.mxu0 0.0
    %537 = vmatprep.subr.mxu0 0.0
    %538 = vmatpush1.msra.mxu0 0.0
    %539 = vmatprep.subr.mxu0 0.0
    %540 = vmatpush1.msra.mxu0 0.0
    %541 = vmatprep.subr.mxu0 0.0
    %542 = vmatpush1.msra.mxu0 0.0
    %543 = vmatprep.subr.mxu0 0.0
    %544 = vmatpush1.msra.mxu0 0.0
    %545 = vmatprep.subr.mxu0 0.0
    %546 = vmatpush1.msra.mxu0 0.0
    %547 = vmatprep.subr.mxu0 0.0
    %548 = vmatpush1.msra.mxu0 0.0
    %549 = vmatprep.subr.mxu0 0.0
    %550 = vmatpush1.msra.mxu0 0.0
    %551 = vmatprep.subr.mxu0 0.0
    %552 = vmatpush1.msra.mxu0 0.0
    %553 = vmatprep.subr.mxu0 0.0
    %554 = vmatpush1.msra.mxu0 0.0
    %555 = vmatprep.subr.mxu0 0.0
    %556 = vmatpush1.msra.mxu0 0.0
    %557 = vmatprep.subr.mxu0 0.0
    %558 = vmatpush1.msra.mxu0 0.0
    %559 = vmatprep.subr.mxu0 0.0
    %560 = vmatpush1.msra.mxu0 0.0
    %561 = vmatprep.subr.mxu0 0.0
    %562 = vmatpush1.msra.mxu0 0.0
    %563 = vmatprep.subr.mxu0 0.0
    %564 = vmatpush1.msra.mxu0 0.0
    %565 = vmatprep.subr.mxu0 0.0
    %566 = vmatpush1.msra.mxu0 0.0
    %567 = vmatprep.mubr.f32.mxu0 0.0
    %568 = vmatmul.mubr.f32.gmra.mrb[0].mxu0 %v296
    %v569 = vpop.f32.mrb[0].mxu0
    %v570 = vadd.f32 %v500, %v569
    %v571 = vpop.f32.mrb[0].mxu0
    %572 = vdwg.mxu0
    %v573 = vld [vmem:[%s4] sm:$0x1]
    %v575 = vlaneseq
    %v576 = vshrl.u32 %v575, 7
    %v577 = vsub.s32 0, %v576
    %v578 = vrot.slane %v573, %v577
    %v580 = vadd.f32 %v570, %v578
    %v581 = vmul.f32 %v580, 0.5
    %v582 = vmul.f32 %v580, 0.70710677
    %v583 = verf.f32.pop %v582
    %v584 = vadd.f32 %v583, 1.0
    %v585 = vmul.f32 %v581, %v584
    %v586 = vld [vmem:[#allocation10] sm:$0xff]
    %v587 = vld [vmem:[#allocation10 + $0x8] sm:$0xff]
    %v588 = vld [vmem:[#allocation10 + $0x10] sm:$0xff]
    %v589 = vld [vmem:[#allocation10 + $0x18] sm:$0xff]
    %v590 = vld [vmem:[#allocation10 + $0x20] sm:$0xff]
    %v591 = vld [vmem:[#allocation10 + $0x28] sm:$0xff]
    %v592 = vld [vmem:[#allocation10 + $0x30] sm:$0xff]
    %v593 = vld [vmem:[#allocation10 + $0x38] sm:$0xff]
    %v594 = vld [vmem:[#allocation10 + $0x40] sm:$0xff]
    %v595 = vld [vmem:[#allocation10 + $0x48] sm:$0xff]
    %v596 = vld [vmem:[#allocation10 + $0x50] sm:$0xff]
    %v597 = vld [vmem:[#allocation10 + $0x58] sm:$0xff]
    %v598 = vld [vmem:[#allocation10 + $0x60] sm:$0xff]
    %v599 = vld [vmem:[#allocation10 + $0x68] sm:$0xff]
    %v600 = vld [vmem:[#allocation10 + $0x70] sm:$0xff]
    %v601 = vld [vmem:[#allocation10 + $0x78] sm:$0xff]
    %v602 = vld [vmem:[%s6] sm:$0x1]
    %v604 = vlaneseq
    %v605 = vshrl.u32 %v604, 7
    %v606 = vsub.s32 0, %v605
    %v607 = vrot.slane %v602, %v606
    %609 = vmatprep.subr.mxu0 0.0
    %610 = vmatpush1.msra.mxu0 %v586
    %611 = vmatprep.subr.mxu0 0.0
    %612 = vmatpush1.msra.mxu0 %v587
    %613 = vmatprep.subr.mxu0 0.0
    %614 = vmatpush1.msra.mxu0 %v588
    %615 = vmatprep.subr.mxu0 0.0
    %616 = vmatpush1.msra.mxu0 %v589
    %617 = vmatprep.subr.mxu0 0.0
    %618 = vmatpush1.msra.mxu0 %v590
    %619 = vmatprep.subr.mxu0 0.0
    %620 = vmatpush1.msra.mxu0 %v591
    %621 = vmatprep.subr.mxu0 0.0
    %622 = vmatpush1.msra.mxu0 %v592
    %623 = vmatprep.subr.mxu0 0.0
    %624 = vmatpush1.msra.mxu0 %v593
    %625 = vmatprep.subr.mxu0 0.0
    %626 = vmatpush1.msra.mxu0 %v594
    %627 = vmatprep.subr.mxu0 0.0
    %628 = vmatpush1.msra.mxu0 %v595
    %629 = vmatprep.subr.mxu0 0.0
    %630 = vmatpush1.msra.mxu0 %v596
    %631 = vmatprep.subr.mxu0 0.0
    %632 = vmatpush1.msra.mxu0 %v597
    %633 = vmatprep.subr.mxu0 0.0
    %634 = vmatpush1.msra.mxu0 %v598
    %635 = vmatprep.subr.mxu0 0.0
    %636 = vmatpush1.msra.mxu0 %v599
    %637 = vmatprep.subr.mxu0 0.0
    %638 = vmatpush1.msra.mxu0 %v600
    %639 = vmatprep.subr.mxu0 0.0
    %640 = vmatpush1.msra.mxu0 %v601
    %641 = vmatprep.subr.mxu0 0.0
    %642 = vmatpush1.msra.mxu0 0.0
    %643 = vmatprep.subr.mxu0 0.0
    %644 = vmatpush1.msra.mxu0 0.0
    %645 = vmatprep.subr.mxu0 0.0
    %646 = vmatpush1.msra.mxu0 0.0
    %647 = vmatprep.subr.mxu0 0.0
    %648 = vmatpush1.msra.mxu0 0.0
    %649 = vmatprep.subr.mxu0 0.0
    %650 = vmatpush1.msra.mxu0 0.0
    %651 = vmatprep.subr.mxu0 0.0
    %652 = vmatpush1.msra.mxu0 0.0
    %653 = vmatprep.subr.mxu0 0.0
    %654 = vmatpush1.msra.mxu0 0.0
    %655 = vmatprep.subr.mxu0 0.0
    %656 = vmatpush1.msra.mxu0 0.0
    %657 = vmatprep.subr.mxu0 0.0
    %658 = vmatpush1.msra.mxu0 0.0
    %659 = vmatprep.subr.mxu0 0.0
    %660 = vmatpush1.msra.mxu0 0.0
    %661 = vmatprep.subr.mxu0 0.0
    %662 = vmatpush1.msra.mxu0 0.0
    %663 = vmatprep.subr.mxu0 0.0
    %664 = vmatpush1.msra.mxu0 0.0
    %665 = vmatprep.subr.mxu0 0.0
    %666 = vmatpush1.msra.mxu0 0.0
    %667 = vmatprep.subr.mxu0 0.0
    %668 = vmatpush1.msra.mxu0 0.0
    %669 = vmatprep.subr.mxu0 0.0
    %670 = vmatpush1.msra.mxu0 0.0
    %671 = vmatprep.subr.mxu0 0.0
    %672 = vmatpush1.msra.mxu0 0.0
    %673 = vmatprep.mubr.f32.mxu0 0.0
    %674 = vmatmul.mubr.f32.gmra.mrb[0].mxu0 %v585
    %v675 = vpop.f32.mrb[0].mxu0
    %v676 = vadd.f32 %v607, %v675
    %v677 = vpop.f32.mrb[0].mxu0
    %678 = vdwg.mxu0
    %v679 = vmul.f32 %v676, 0.5
    %v680 = vmul.f32 %v676, 0.70710677
    %v681 = verf.f32.pop %v680
    %v682 = vadd.f32 %v681, 1.0
    %v683 = vmul.f32 %v679, %v682
    %v684 = vld [vmem:[#allocation11] sm:$0xff]
    %v685 = vld [vmem:[#allocation11 + $0x8] sm:$0xff]
    %v686 = vld [vmem:[#allocation11 + $0x10] sm:$0xff]
    %v687 = vld [vmem:[#allocation11 + $0x18] sm:$0xff]
    %v688 = vld [vmem:[#allocation11 + $0x20] sm:$0xff]
    %v689 = vld [vmem:[#allocation11 + $0x28] sm:$0xff]
    %v690 = vld [vmem:[#allocation11 + $0x30] sm:$0xff]
    %v691 = vld [vmem:[#allocation11 + $0x38] sm:$0xff]
    %v692 = vld [vmem:[#allocation11 + $0x40] sm:$0xff]
    %v693 = vld [vmem:[#allocation11 + $0x48] sm:$0xff]
    %v694 = vld [vmem:[#allocation11 + $0x50] sm:$0xff]
    %v695 = vld [vmem:[#allocation11 + $0x58] sm:$0xff]
    %v696 = vld [vmem:[#allocation11 + $0x60] sm:$0xff]
    %v697 = vld [vmem:[#allocation11 + $0x68] sm:$0xff]
    %v698 = vld [vmem:[#allocation11 + $0x70] sm:$0xff]
    %v699 = vld [vmem:[#allocation11 + $0x78] sm:$0xff]
    %v700 = vld [vmem:[%s8] sm:$0x1]
    %v702 = vlaneseq
    %v703 = vshrl.u32 %v702, 7
    %v704 = vsub.s32 0, %v703
    %v705 = vrot.slane %v700, %v704
    %707 = vmatprep.subr.mxu0 0.0
    %708 = vmatpush1.msra.mxu0 %v684
    %709 = vmatprep.subr.mxu0 0.0
    %710 = vmatpush1.msra.mxu0 %v685
    %711 = vmatprep.subr.mxu0 0.0
    %712 = vmatpush1.msra.mxu0 %v686
    %713 = vmatprep.subr.mxu0 0.0
    %714 = vmatpush1.msra.mxu0 %v687
    %715 = vmatprep.subr.mxu0 0.0
    %716 = vmatpush1.msra.mxu0 %v688
    %717 = vmatprep.subr.mxu0 0.0
    %718 = vmatpush1.msra.mxu0 %v689
    %719 = vmatprep.subr.mxu0 0.0
    %720 = vmatpush1.msra.mxu0 %v690
    %721 = vmatprep.subr.mxu0 0.0
    %722 = vmatpush1.msra.mxu0 %v691
    %723 = vmatprep.subr.mxu0 0.0
    %724 = vmatpush1.msra.mxu0 %v692
    %725 = vmatprep.subr.mxu0 0.0
    %726 = vmatpush1.msra.mxu0 %v693
    %727 = vmatprep.subr.mxu0 0.0
    %728 = vmatpush1.msra.mxu0 %v694
    %729 = vmatprep.subr.mxu0 0.0
    %730 = vmatpush1.msra.mxu0 %v695
    %731 = vmatprep.subr.mxu0 0.0
    %732 = vmatpush1.msra.mxu0 %v696
    %733 = vmatprep.subr.mxu0 0.0
    %734 = vmatpush1.msra.mxu0 %v697
    %735 = vmatprep.subr.mxu0 0.0
    %736 = vmatpush1.msra.mxu0 %v698
    %737 = vmatprep.subr.mxu0 0.0
    %738 = vmatpush1.msra.mxu0 %v699
    %739 = vmatprep.subr.mxu0 0.0
    %740 = vmatpush1.msra.mxu0 0.0
    %741 = vmatprep.subr.mxu0 0.0
    %742 = vmatpush1.msra.mxu0 0.0
    %743 = vmatprep.subr.mxu0 0.0
    %744 = vmatpush1.msra.mxu0 0.0
    %745 = vmatprep.subr.mxu0 0.0
    %746 = vmatpush1.msra.mxu0 0.0
    %747 = vmatprep.subr.mxu0 0.0
    %748 = vmatpush1.msra.mxu0 0.0
    %749 = vmatprep.subr.mxu0 0.0
    %750 = vmatpush1.msra.mxu0 0.0
    %751 = vmatprep.subr.mxu0 0.0
    %752 = vmatpush1.msra.mxu0 0.0
    %753 = vmatprep.subr.mxu0 0.0
    %754 = vmatpush1.msra.mxu0 0.0
    %755 = vmatprep.subr.mxu0 0.0
    %756 = vmatpush1.msra.mxu0 0.0
    %757 = vmatprep.subr.mxu0 0.0
    %758 = vmatpush1.msra.mxu0 0.0
    %759 = vmatprep.subr.mxu0 0.0
    %760 = vmatpush1.msra.mxu0 0.0
    %761 = vmatprep.subr.mxu0 0.0
    %762 = vmatpush1.msra.mxu0 0.0
    %763 = vmatprep.subr.mxu0 0.0
    %764 = vmatpush1.msra.mxu0 0.0
    %765 = vmatprep.subr.mxu0 0.0
    %766 = vmatpush1.msra.mxu0 0.0
    %767 = vmatprep.subr.mxu0 0.0
    %768 = vmatpush1.msra.mxu0 0.0
    %769 = vmatprep.subr.mxu0 0.0
    %770 = vmatpush1.msra.mxu0 0.0
    %771 = vmatprep.mubr.f32.mxu0 0.0
    %772 = vmatmul.mubr.f32.gmra.mrb[0].mxu0 %v683
    %v773 = vpop.f32.mrb[0].mxu0
    %v774 = vadd.f32 %v705, %v773
    %v775 = vpop.f32.mrb[0].mxu0
    %776 = vdwg.mxu0
    %v777 = vmul.f32 %v774, 0.5
    %v778 = vmul.f32 %v774, 0.70710677
    %v779 = verf.f32.pop %v778
    %v780 = vadd.f32 %v779, 1.0
    %v781 = vmul.f32 %v777, %v780
    %782 = vst [vmem:[#allocation13] sm:$0xff] %v781
    // Predicated region
    $region62: #{tpu_custom_call.1} parent=1 // pred_check
      _
    $region63: #{tpu_custom_call.1} parent=1 // pred_check_branch
      %784 = sbr.rel (0) target = $region65
    $region64: #{tpu_custom_call.1} parent=1 // pred_region
      %s786 = ssub.s32 128, 128
      %787 = vsyncadd [#allocation4], %s786
      %s789 = sshll.u32 [#allocation13], 4
      %s790 = int_to_ptr.vmem [resolvable:$true] %s789
      %792 = dma.vmem_to_hbm [thread:$0]  %s790, 128, %s9, [#allocation4]
    $region65: #{tpu_custom_call.1} parent=1 // pred_fallthru
      _
    // Predicated region
    $region66: #{tpu_custom_call.1} parent=1 // pred_check
      _
    $region67: #{tpu_custom_call.1} parent=1 // pred_check_branch
      %794 = sbr.rel (0) target = $region69
    $region68: #{tpu_custom_call.1} parent=1 // pred_region
      %795 = dma.done [#allocation4], 128
    $region69: #{tpu_custom_call.1} parent=1 // pred_fallthru
      _
    %796 = vsyncpa [#allocation3], 1
    %797 = vsyncpa [#allocation6], 1
    %798 = vsyncpa [#allocation9], 1
    %799 = vsyncpa [#allocation12], 1
    %800 = vsyncpa [#allocation4], 1

</llo_original>
